<compile_context>
chip_gen: v5e
topology: v5e:2x2
jax: 0.10.0
libtpu: 0.0.40
codegen_flags: <defaults>
</compile_context>

<pallas_src>
import jax
import jax.numpy as jnp
from jax import lax
from jax.experimental import pallas as pl
from jax.experimental.pallas import tpu as pltpu

TOK_MAX = 2048           # max tokens gathered per grid step (output block rows)
V_TILE = 512             # vocab tile for the large-table path (keeps MXU K-dim full)
_STEP_SLACK = 2 << 20    # Mosaic internal scratch slack per step


def _round_up(x, m):
    return ((x + m - 1) // m) * m


def _sublane_multiple(dtype):
    # sub-32-bit dtypes pack rows along sublanes: 8 (4B) / 16 (2B) / 32 (1B)
    return 8 * (4 // jnp.dtype(dtype).itemsize)


def _vmem_budget():
    """(usable_budget_bytes, physical_capacity_bytes), generation-aware."""
    try:
        cap = int(pltpu.get_tpu_info().vmem_capacity_bytes)
    except Exception:
        cap = 64 * 1024 * 1024  # conservative fallback = v7x per-TC VMEM
    margin = max(8 << 20, cap // 8)  # ~8 MiB on v7x, ~16 MiB on v5e/v6e
    return cap - margin, cap


def _embed_resident_kernel(ids_ref, emb_ref, out_ref):
    # ids_ref: VMEM (TOK, 1) int32   -- token ids for this block
    # emb_ref: VMEM (V, D)           -- full table, resident (untiled, 1 copy)
    # out_ref: VMEM (TOK, D)         -- gathered embeddings (one dense store)
    tok = ids_ref.shape[0]
    v = emb_ref.shape[0]
    ids = ids_ref[...]                                        # (TOK, 1)
    col = lax.broadcasted_iota(jnp.int32, (tok, v), 1)        # (TOK, V)
    onehot = (ids == col).astype(emb_ref.dtype)               # VPU compare
    out_ref[...] = jnp.dot(
        onehot, emb_ref[...],
        preferred_element_type=jnp.float32,
        precision=lax.Precision.HIGHEST,                      # bit-exact f32 gather
    ).astype(out_ref.dtype)


def _embed_vtiled_kernel(ids_ref, emb_ref, out_ref, acc_ref):
    # ids_ref: VMEM (TOK, 1) int32   -- same ids block across all V tiles
    # emb_ref: VMEM (TV, D)          -- streamed vocab tile j
    # out_ref: VMEM (TOK, D)         -- written once, on the last V tile
    # acc_ref: VMEM (TOK, D) f32     -- accumulator scratch across V tiles
    j = pl.program_id(1)

    @pl.when(j == 0)
    def _():
        acc_ref[...] = jnp.zeros_like(acc_ref)

    tok = ids_ref.shape[0]
    tv = emb_ref.shape[0]
    ids = ids_ref[...]                                        # (TOK, 1)
    col = lax.broadcasted_iota(jnp.int32, (tok, tv), 1) + j * tv
    onehot = (ids == col).astype(emb_ref.dtype)
    acc_ref[...] += jnp.dot(
        onehot, emb_ref[...],
        preferred_element_type=jnp.float32,
        precision=lax.Precision.HIGHEST,
    )

    @pl.when(j == pl.num_programs(1) - 1)
    def _():
        out_ref[...] = acc_ref[...].astype(out_ref.dtype)


def word_embedding(indices, emb_table, *, force_v_tiling=False):
    """Pallas equivalent of nn.Embedding forward.

    indices:   int array, arbitrary shape (e.g. (B, S))
    emb_table: (V, D) float array
    returns:   float array of shape indices.shape + (D,)
    """
    V, D = emb_table.shape
    orig_shape = indices.shape
    flat = indices.reshape(-1).astype(jnp.int32)
    N = flat.shape[0]
    itemsize = jnp.dtype(emb_table.dtype).itemsize
    sub = _sublane_multiple(emb_table.dtype)

    # Lane-dense output: pad D to a multiple of 128 once, slice back after.
    D_pad = _round_up(D, 128)
    if D_pad != D:
        emb_table = jnp.pad(emb_table, ((0, 0), (0, D_pad - D)))

    budget, _cap = _vmem_budget()

    def resident_bytes(t):
        return (V * D_pad * itemsize              # table, single VMEM copy
                + 2 * t * D_pad * itemsize        # double-buffered output blocks
                + 2 * t * 4                       # double-buffered id blocks
                + 3 * t * V * 4                   # (TOK,V) iota/compare/onehot live values
                + _STEP_SLACK)

    def tiled_bytes(t, tv):
        return (2 * tv * D_pad * itemsize         # double-buffered table tiles
                + 2 * t * D_pad * itemsize        # double-buffered output blocks
                + t * D_pad * 4                   # accumulator scratch
                + 2 * t * 4                       # double-buffered id blocks
                + 3 * t * tv * 4                  # (TOK,TV) intermediates
                + _STEP_SLACK)

    # Token block: as large as possible but always >=2 grid steps so v7x's
    # second TensorCore gets work; shrink until the VMEM plan fits.
    tok = max(sub, min(TOK_MAX, _round_up(pl.cdiv(N, 2), sub)))

    use_resident = not force_v_tiling
    if use_resident:
        t = tok
        while t > sub and resident_bytes(t) > budget:
            t = max(sub, _round_up(t // 2, sub))
        if resident_bytes(t) <= budget:
            tok = t
        else:
            use_resident = False   # table (+ intermediates) too big: tile V

    if not use_resident:
        tv = min(_round_up(V, sub), V_TILE)
        t = tok
        while t > sub and tiled_bytes(t, tv) > budget:
            t = max(sub, _round_up(t // 2, sub))
        while tv > sub and tiled_bytes(t, tv) > budget:
            tv = max(sub, _round_up(tv // 2, sub))
        tok = t

    grid_tok = pl.cdiv(N, tok)
    n_padded = grid_tok * tok
    if n_padded != N:  # pad ids only; out_shape stays (N, D) -> ragged tail masked
        flat = jnp.concatenate([flat, jnp.zeros((n_padded - N,), jnp.int32)])
    ids2d = flat.reshape(n_padded, 1)

    if use_resident:
        vmem_limit = int(min(max(resident_bytes(tok), 16 << 20), budget))
        out = pl.pallas_call(
            _embed_resident_kernel,
            out_shape=jax.ShapeDtypeStruct((N, D_pad), emb_table.dtype),
            grid_spec=pltpu.PrefetchScalarGridSpec(
                num_scalar_prefetch=0,
                grid=(grid_tok,),
                in_specs=[
                    # token-id blocks, pipelined normally
                    pl.BlockSpec((tok, 1), lambda i: (i, 0)),
                    # whole table placed in VMEM exactly once (no per-step
                    # re-DMA, no double buffer of the grid-invariant operand)
                    pl.BlockSpec(memory_space=pltpu.MemorySpace.VMEM),
                ],
                out_specs=pl.BlockSpec((tok, D_pad), lambda i: (i, 0)),
            ),
            compiler_params=pltpu.CompilerParams(
                dimension_semantics=("parallel",),   # disjoint output blocks
                vmem_limit_bytes=vmem_limit,
            ),
        )(ids2d, emb_table)
    else:
        V_padded = _round_up(V, tv)
        if V_padded != V:  # zero rows: never selected by valid ids
            emb_table = jnp.pad(emb_table, ((0, V_padded - V), (0, 0)))
        grid_v = V_padded // tv
        vmem_limit = int(min(max(tiled_bytes(tok, tv), 16 << 20), budget))
        out = pl.pallas_call(
            _embed_vtiled_kernel,
            out_shape=jax.ShapeDtypeStruct((N, D_pad), emb_table.dtype),
            grid_spec=pltpu.PrefetchScalarGridSpec(
                num_scalar_prefetch=0,
                grid=(grid_tok, grid_v),
                in_specs=[
                    pl.BlockSpec((tok, 1), lambda i, j: (i, 0)),
                    pl.BlockSpec((tv, D_pad), lambda i, j: (j, 0)),
                ],
                out_specs=pl.BlockSpec((tok, D_pad), lambda i, j: (i, 0)),
                scratch_shapes=[pltpu.VMEM((tok, D_pad), jnp.float32)],
            ),
            compiler_params=pltpu.CompilerParams(
                dimension_semantics=("parallel", "arbitrary"),
                vmem_limit_bytes=vmem_limit,
            ),
        )(ids2d, emb_table)

    if D_pad != D:
        out = out[:, :D]
    return out.reshape(*orig_shape, D)


if __name__ == "__main__":
    key = jax.random.PRNGKey(0)
    k_w, k_idx = jax.random.split(key)

    vocab_length = 64
    embedding_dim = 128
    batch, seq = 2, 8

    # deterministic init matching np.random.uniform(-1, 1, (V, D)).float()
    emb_table = jax.random.uniform(
        k_w, (vocab_length, embedding_dim), dtype=jnp.float32,
        minval=-1.0, maxval=1.0,
    )
    input_sentence = jax.random.randint(
        k_idx, (batch, seq), 0, vocab_length, dtype=jnp.int32
    )

    ref = emb_table[input_sentence]  # == torch.nn.Embedding semantics

    # fast path: VMEM-resident table, 1-D parallel grid
    out = word_embedding(input_sentence, emb_table)
    out = jax.block_until_ready(out)
    assert out.shape == (batch, seq, embedding_dim)
    assert jnp.allclose(out, ref, rtol=0.0, atol=1e-5), "resident path mismatch"

    # large-vocab path (V tiled as 'arbitrary' axis + accumulator), forced so
    # both code paths are exercised / verified at small shapes
    out_t = word_embedding(input_sentence, emb_table, force_v_tiling=True)
    out_t = jax.block_until_ready(out_t)
    assert jnp.allclose(out_t, ref, rtol=0.0, atol=1e-5), "v-tiled path mismatch"

    print("KERNEL_OK")
</pallas_src>

<mosaic_0001>
module attributes {stable_mosaic.version = 11 : i64} {
  func.func @_embed_resident_kernel(%arg0: i32, %arg1: memref<8x1xi32, #tpu.memory_space<vmem>>, %arg2: memref<64x128xf32, #tpu.memory_space<vmem>>, %arg3: memref<8x128xf32, #tpu.memory_space<vmem>>) attributes {dimension_semantics = [#tpu.dimension_semantics<parallel>], iteration_bounds = array<i64: 2>, scalar_prefetch = 0 : i64, scratch_operands = 0 : i64, tpu.core_type = #tpu.core_type<tc>, window_params = [{transform_indices = @transform_0, window_bounds = array<i64: 8, 1>}, {pipeline_mode = #tpu.pipeline_mode<synchronous>, transform_indices = @transform_1, window_bounds = array<i64: 64, 128>}, {transform_indices = @transform_2, window_bounds = array<i64: 8, 128>}]} {
    %c0 = arith.constant 0 : index
    %c0_0 = arith.constant 0 : index
    %0 = vector.load %arg1[%c0, %c0_0] : memref<8x1xi32, #tpu.memory_space<vmem>>, vector<8x1xi32>
    %1 = tpu.iota {dimensions = array<i32: 1>} : vector<8x64xi32>
    %2 = vector.broadcast %0 : vector<8x1xi32> to vector<8x64xi32>
    %3 = arith.cmpi eq, %2, %1 : vector<8x64xi32>
    %4 = arith.extui %3 : vector<8x64xi1> to vector<8x64xi32>
    %5 = arith.sitofp %4 : vector<8x64xi32> to vector<8x64xf32>
    %c0_1 = arith.constant 0 : index
    %c0_2 = arith.constant 0 : index
    %6 = vector.load %arg2[%c0_1, %c0_2] : memref<64x128xf32, #tpu.memory_space<vmem>>, vector<64x128xf32>
    %cst = arith.constant dense<0.000000e+00> : vector<8x128xf32>
    %7 = tpu.matmul %5, %6, %cst {dimension_numbers = #tpu.dot_dimension_numbers<[1], [0], [0], [1], [0, 0, 1, 1], [], []>, precision = #tpu.contract_precision<fp32>} : vector<8x64xf32>, vector<64x128xf32>, vector<8x128xf32> -> vector<8x128xf32>
    %c0_3 = arith.constant 0 : index
    %c0_4 = arith.constant 0 : index
    %8 = vector.load %arg3[%c0_3, %c0_4] : memref<8x128xf32, #tpu.memory_space<vmem>>, vector<8x128xf32>
    tpu.vector_store %arg3[%c0_3, %c0_4], %7 {strides = array<i32>} : memref<8x128xf32, #tpu.memory_space<vmem>>, vector<8x128xf32>,
    return
  }
  func.func @transform_0(%arg0: i32) -> (i32, i32) {
    %c0_i32 = arith.constant 0 : i32
    %c0_i32_0 = arith.constant 0 : i32
    return %arg0, %c0_i32 : i32, i32
  }
  func.func @transform_1(%arg0: i32) -> (i32, i32) {
    %c0_i32 = arith.constant 0 : i32
    %c0_i32_0 = arith.constant 0 : i32
    %c0_i32_1 = arith.constant 0 : i32
    return %c0_i32, %c0_i32_0 : i32, i32
  }
  func.func @transform_2(%arg0: i32) -> (i32, i32) {
    %c0_i32 = arith.constant 0 : i32
    %c0_i32_0 = arith.constant 0 : i32
    return %arg0, %c0_i32 : i32, i32
  }
}

</mosaic_0001>

<llo_original>
// kernel: tpu_custom_call.1
$region0: #{tpu_custom_call.1}
  #allocation0 [shape = 'u32[]', space=smem, size = 0x4, offset = 0x4, fixed_abs, tag = 'smem constant byte address 0x4 - core index']
  #allocation1 [shape = 'u32[72,128]{1,0:T(1,128)}', space=vmem, size = 0x9000, scoped, tag = 'internal scratch']
  %s0 = inlined_call_operand.vmem [shape: s32[16,1], index: 0, kind: input, shape index: {}]
  %s1 = inlined_call_operand.hbm [shape: f32[64,128], index: 1, kind: input, shape index: {}]
  %s2 = inlined_call_operand.hbm [shape: f32[16,128], index: 2, kind: output, shape index: {}]
  %s3 = sld [smem:[#allocation0]]
  $region45: #{tpu_custom_call.1} parent=0
    _
  %s5 = ssub.s32 1, %s3
  %s6 = scalar_select 0, %s5, %s3
  $region1: #{tpu_custom_call.1} parent=0
    #allocation2 [shape = 'u8[32768]{0}', space=vmem, size = 0x8000, scoped, tag = 'input window, operand 1, single buffered']
    #allocation3 [shape = 's32[2]{0}', space=sflag, size = 0x8, scoped, tag = 'scoped memory for tpu_custom_call.1']
    #allocation4 [shape = 's32[2]{0}', space=sflag, size = 0x8, scoped, tag = 'scoped memory for tpu_custom_call.1']
    #allocation5 [shape = 'u8[8192]{0}', space=vmem, size = 0x2000, scoped, tag = 'output window, operand 0']
    %7 = vsyncpa [#allocation3], 0
    %8 = vsyncpa [#allocation4], 0
    %s9 = scalar_lea.sflag [#allocation4], 1
    %10 = vsyncpa %s9, 0
    loop: start=0, step=1, limit=4
    $region2: #{tpu_custom_call.1} parent=1 // loop_pre_header
      _
    $region3: #{tpu_custom_call.1} parent=1 // loop_header
      %s12 = sphi 0, %s16
      %p13 = scmp.ge.s32.totalorder %s12, 4
      %s22 = sphi 0, %s24
      %s25 = sphi 0, %s22
      %s26 = sphi 0, %s25
      %s42 = sphi 0, %s26
      %s46 = sphi 0, %s46
      %s48 = sphi 0, %s46
      %s49 = sphi 0, %s48
      %s63 = sphi 0, %s49
      %s69 = sphi 0, %s71
      %s72 = sphi 0, %s69
      %s73 = sphi 0, %s72
      %s89 = sphi 0, %s73
    $region4: #{tpu_custom_call.1} parent=1 // loop_header_branch
      %15 = sbr.rel (%p13) target = $region8
    $region5: #{tpu_custom_call.1} parent=1 // loop_body
      %s17 = ssub.s32 %s12, 1
      %s18 = ssub.s32 %s12, 2
      %s19 = sadd.s32 %s12, 1
      %s20 = ssub.s32 %s12, %s19
      %p21 = scmp.eq.s32.totalorder %s20, 0
      %s23 = sadd.s32 %s22, 1
      %s24 = scalar_select %p21, %s22, %s23
      %p27 = pneg %p21
      %p28 = scmp.eq.s32.totalorder %s12, 1
      %p29 = por %p27, %p28
      %p30 = scmp.ne.s32.totalorder %s22, %s25
      %p31 = scmp.eq.s32.totalorder %s12, 0
      %p32 = por %p30, %p31
      %p33 = scmp.ne.s32.totalorder %s22, %s25
      %p34 = scmp.eq.s32.totalorder %s17, 1
      %p35 = por %p33, %p34
      %p36 = scmp.ne.s32.totalorder %s25, %s26
      %p37 = scmp.eq.s32.totalorder %s17, 0
      %p38 = por %p36, %p37
      %p39 = scmp.ne.s32.totalorder %s25, %s26
      %p40 = scmp.eq.s32.totalorder %s18, 1
      %p41 = por %p39, %p40
      %p43 = scmp.ne.s32.totalorder %s26, %s42
      %p44 = scmp.eq.s32.totalorder %s18, 0
      %p45 = por %p43, %p44
      %s47 = sadd.s32 %s46, 1
      %p50 = scmp.eq.s32.totalorder %s12, 1
      %p51 = scmp.ne.s32.totalorder %s46, %s48
      %p52 = scmp.eq.s32.totalorder %s12, 0
      %p53 = por %p51, %p52
      %p54 = scmp.ne.s32.totalorder %s46, %s48
      %p55 = scmp.eq.s32.totalorder %s17, 1
      %p56 = por %p54, %p55
      %p57 = scmp.ne.s32.totalorder %s48, %s49
      %p58 = scmp.eq.s32.totalorder %s17, 0
      %p59 = por %p57, %p58
      %p60 = scmp.ne.s32.totalorder %s48, %s49
      %p61 = scmp.eq.s32.totalorder %s18, 1
      %p62 = por %p60, %p61
      %p64 = scmp.ne.s32.totalorder %s49, %s63
      %p65 = scmp.eq.s32.totalorder %s18, 0
      %p66 = por %p64, %p65
      %s67 = ssub.s32 %s12, %s19
      %p68 = scmp.eq.s32.totalorder %s67, 0
      %s70 = sadd.s32 %s69, 1
      %s71 = scalar_select %p68, %s69, %s70
      %p74 = pneg %p68
      %p75 = scmp.eq.s32.totalorder %s12, 1
      %p76 = por %p74, %p75
      %p77 = scmp.ne.s32.totalorder %s69, %s72
      %p78 = scmp.eq.s32.totalorder %s12, 0
      %p79 = por %p77, %p78
      %p80 = scmp.ne.s32.totalorder %s69, %s72
      %p81 = scmp.eq.s32.totalorder %s17, 1
      %p82 = por %p80, %p81
      %p83 = scmp.ne.s32.totalorder %s72, %s73
      %p84 = scmp.eq.s32.totalorder %s17, 0
      %p85 = por %p83, %p84
      %p86 = scmp.ne.s32.totalorder %s72, %s73
      %p87 = scmp.eq.s32.totalorder %s18, 1
      %p88 = por %p86, %p87
      %p90 = scmp.ne.s32.totalorder %s73, %s89
      %p91 = scmp.eq.s32.totalorder %s18, 0
      %p92 = por %p90, %p91
      %p93 = scmp.le.s32.totalorder 1, %s12
      %p94 = scmp.lt.s32.totalorder %s12, 3
      %p95 = pnand %p93, %p94
      %p96 = pneg %p95
      // Predicated region
      $region9: #{tpu_custom_call.1} parent=5 // pred_check
        _
      $region10: #{tpu_custom_call.1} parent=5 // pred_check_branch
        %98 = sbr.rel (%p95) target = $region12
      $region11: #{tpu_custom_call.1} parent=5 // pred_region
        %s99 = ssub.s32 %s12, 1
        // Predicated region
        $region13: #{tpu_custom_call.1} parent=11 // pred_check
          %p100 = pneg %p59
        $region14: #{tpu_custom_call.1} parent=11 // pred_check_branch
          %102 = sbr.rel (%p100) target = $region16
        $region15: #{tpu_custom_call.1} parent=11 // pred_region
          %104 = vsyncadd [#allocation3], 0
          %s105 = sshll.u32 %s1, 4
          %s106 = int_to_ptr.hbm [resolvable:$true] %s105
          %s107 = sshll.u32 [#allocation2], 4
          %s108 = int_to_ptr.vmem [resolvable:$true] %s107
          %113 = dma.hbm_to_vmem [thread:$0]  %s106, 1024, %s108, [#allocation3], 128, 128, 8
        $region16: #{tpu_custom_call.1} parent=11 // pred_fallthru
          _
      $region12: #{tpu_custom_call.1} parent=5 // pred_fallthru
        _
      %p114 = scmp.lt.s32.totalorder %s12, 2
      // Predicated region
      $region17: #{tpu_custom_call.1} parent=5 // pred_check
        %p115 = pneg %p114
      $region18: #{tpu_custom_call.1} parent=5 // pred_check_branch
        %117 = sbr.rel (%p115) target = $region20
      $region19: #{tpu_custom_call.1} parent=5 // pred_region
        // Predicated region
        $region21: #{tpu_custom_call.1} parent=19 // pred_check
          %p118 = pneg %p32
        $region22: #{tpu_custom_call.1} parent=19 // pred_check_branch
          %120 = sbr.rel (%p118) target = $region24
        $region23: #{tpu_custom_call.1} parent=19 // pred_region
          %p121 = scmp.lt.s32.totalorder %s12, 1
          %s122 = scalar_select %p121, %s12, 1
          %s123 = smul.addr %s122, 8
          %s124 = scalar_lea.vmem %s0, %s123
        $region24: #{tpu_custom_call.1} parent=19 // pred_fallthru
          _
      $region20: #{tpu_custom_call.1} parent=5 // pred_fallthru
        _
      %p125 = scmp.le.s32.totalorder 1, %s12
      %p126 = scmp.lt.s32.totalorder %s12, 3
      %p127 = pnand %p125, %p126
      %p128 = pneg %p127
      // Predicated region
      $region25: #{tpu_custom_call.1} parent=5 // pred_check
        _
      $region26: #{tpu_custom_call.1} parent=5 // pred_check_branch
        %130 = sbr.rel (%p127) target = $region28
      $region27: #{tpu_custom_call.1} parent=5 // pred_region
        %s131 = ssub.s32 %s12, 1
        // Predicated region
        $region29: #{tpu_custom_call.1} parent=27 // pred_check
          %p132 = pneg %p59
        $region30: #{tpu_custom_call.1} parent=27 // pred_check_branch
          %134 = sbr.rel (%p132) target = $region32
        $region31: #{tpu_custom_call.1} parent=27 // pred_region
          %136 = dma.done [#allocation3], 1024
        $region32: #{tpu_custom_call.1} parent=27 // pred_fallthru
          _
        %p137 = scmp.lt.s32.totalorder %s17, 1
        %s138 = scalar_select %p137, %s17, 1
        %s139 = smul.addr %s138, 8
        %s140 = scalar_lea.vmem %s0, %s139
        %p141 = pneg %p38
        %p142 = pneg %p35
        %p143 = pneg %p59
        %p144 = pneg %p56
        %p145 = pneg %p85
        %p146 = pneg %p82
        %s147 = sand.u32 %s72, 1
        %s148 = scalar_lea.sflag [#allocation4], %s147
        %s149 = sand.u32 %s72, 1
        %s150 = smul.addr %s149, 8
        %s151 = scalar_lea.vmem [#allocation5], %s150
        %p152 = scmp.lt.s32.totalorder %s17, 1
        %s153 = scalar_select %p152, %s17, 1
        %s154 = smul.addr %s153, 8
        %s155 = scalar_lea.vmem %s0, %s154
        %v156 = vld [vmem:[%s155] sm:$0xff]
        %v157 = vlaneseq
        %v158 = vand.u32 %v157, 127
        %159 = vset.pattern.permute.xlu0 0
        %160 = vperm.xlu0 %159, %v156
        %v161 = vpop.permute.xlu0 %160
        %vm162 = vcmp.eq.s32.totalorder %v161, %v158
        %v163 = vsel %vm162, 1, 0
        %v164 = vcvt.s32.f32 %v163
        %v165 = vld [vmem:[#allocation2] sm:$0xff]
        %v166 = vld [vmem:[#allocation2 + $0x8] sm:$0xff]
        %v167 = vld [vmem:[#allocation2 + $0x10] sm:$0xff]
        %v168 = vld [vmem:[#allocation2 + $0x18] sm:$0xff]
        %v169 = vld [vmem:[#allocation2 + $0x20] sm:$0xff]
        %v170 = vld [vmem:[#allocation2 + $0x28] sm:$0xff]
        %v171 = vld [vmem:[#allocation2 + $0x30] sm:$0xff]
        %v172 = vld [vmem:[#allocation2 + $0x38] sm:$0xff]
        %vm173 = vcmask 523264
        %v175 = vsel %vm173, %v164, 0
        %177 = vmatpush.msra.mxu0 0.0
        %178 = vmatpush.msra.mxu0 0.0
        %179 = vmatpush.msra.mxu0 0.0
        %180 = vmatpush.msra.mxu0 0.0
        %181 = vmatpush.msra.mxu0 0.0
        %182 = vmatpush.msra.mxu0 0.0
        %183 = vmatpush.msra.mxu0 0.0
        %184 = vmatpush.msra.mxu0 0.0
        %v185 = vand.u32 %v172, 4294901760
        %186 = vmatpush.msra.mxu0 %v185
        %v187 = vand.u32 %v171, 4294901760
        %188 = vmatpush.msra.mxu0 %v187
        %v189 = vand.u32 %v170, 4294901760
        %190 = vmatpush.msra.mxu0 %v189
        %v191 = vand.u32 %v169, 4294901760
        %192 = vmatpush.msra.mxu0 %v191
        %v193 = vand.u32 %v168, 4294901760
        %194 = vmatpush.msra.mxu0 %v193
        %v195 = vand.u32 %v167, 4294901760
        %196 = vmatpush.msra.mxu0 %v195
        %v197 = vand.u32 %v166, 4294901760
        %198 = vmatpush.msra.mxu0 %v197
        %v199 = vand.u32 %v165, 4294901760
        %200 = vmatpush.msra.mxu0 %v199
        %v201 = vand.u32 %v175, 4294901760
        %v202 = vsub.f32 %v175, %v201
        %v203 = vand.u32 %v202, 4294901760
        %v204 = vsub.f32 %v202, %v203
        %v205 = vand.u32 %v204, 4294901760
        %206 = vmatmul.f32.gmra.mxu0 %v205
        %v207 = vpop.f32.mrf.mxu0
        %v208 = vadd.f32 0.0, %v207
        %209 = vdwg.mxu0
        %210 = vmatpush.msra.mxu0 0.0
        %211 = vmatpush.msra.mxu0 0.0
        %212 = vmatpush.msra.mxu0 0.0
        %213 = vmatpush.msra.mxu0 0.0
        %214 = vmatpush.msra.mxu0 0.0
        %215 = vmatpush.msra.mxu0 0.0
        %216 = vmatpush.msra.mxu0 0.0
        %217 = vmatpush.msra.mxu0 0.0
        %v218 = vand.u32 %v172, 4294901760
        %v219 = vsub.f32 %v172, %v218
        %v220 = vand.u32 %v219, 4294901760
        %v221 = vsub.f32 %v219, %v220
        %v222 = vand.u32 %v221, 4294901760
        %223 = vmatpush.msra.mxu0 %v222
        %v224 = vand.u32 %v171, 4294901760
        %v225 = vsub.f32 %v171, %v224
        %v226 = vand.u32 %v225, 4294901760
        %v227 = vsub.f32 %v225, %v226
        %v228 = vand.u32 %v227, 4294901760
        %229 = vmatpush.msra.mxu0 %v228
        %v230 = vand.u32 %v170, 4294901760
        %v231 = vsub.f32 %v170, %v230
        %v232 = vand.u32 %v231, 4294901760
        %v233 = vsub.f32 %v231, %v232
        %v234 = vand.u32 %v233, 4294901760
        %235 = vmatpush.msra.mxu0 %v234
        %v236 = vand.u32 %v169, 4294901760
        %v237 = vsub.f32 %v169, %v236
        %v238 = vand.u32 %v237, 4294901760
        %v239 = vsub.f32 %v237, %v238
        %v240 = vand.u32 %v239, 4294901760
        %241 = vmatpush.msra.mxu0 %v240
        %v242 = vand.u32 %v168, 4294901760
        %v243 = vsub.f32 %v168, %v242
        %v244 = vand.u32 %v243, 4294901760
        %v245 = vsub.f32 %v243, %v244
        %v246 = vand.u32 %v245, 4294901760
        %247 = vmatpush.msra.mxu0 %v246
        %v248 = vand.u32 %v167, 4294901760
        %v249 = vsub.f32 %v167, %v248
        %v250 = vand.u32 %v249, 4294901760
        %v251 = vsub.f32 %v249, %v250
        %v252 = vand.u32 %v251, 4294901760
        %253 = vmatpush.msra.mxu0 %v252
        %v254 = vand.u32 %v166, 4294901760
        %v255 = vsub.f32 %v166, %v254
        %v256 = vand.u32 %v255, 4294901760
        %v257 = vsub.f32 %v255, %v256
        %v258 = vand.u32 %v257, 4294901760
        %259 = vmatpush.msra.mxu0 %v258
        %v260 = vand.u32 %v165, 4294901760
        %v261 = vsub.f32 %v165, %v260
        %v262 = vand.u32 %v261, 4294901760
        %v263 = vsub.f32 %v261, %v262
        %v264 = vand.u32 %v263, 4294901760
        %265 = vmatpush.msra.mxu0 %v264
        %v266 = vand.u32 %v175, 4294901760
        %267 = vmatmul.f32.gmra.mxu0 %v266
        %v268 = vpop.f32.mrf.mxu0
        %v269 = vadd.f32 %v208, %v268
        %270 = vdwg.mxu0
        %271 = vmatpush.msra.mxu0 0.0
        %272 = vmatpush.msra.mxu0 0.0
        %273 = vmatpush.msra.mxu0 0.0
        %274 = vmatpush.msra.mxu0 0.0
        %275 = vmatpush.msra.mxu0 0.0
        %276 = vmatpush.msra.mxu0 0.0
        %277 = vmatpush.msra.mxu0 0.0
        %278 = vmatpush.msra.mxu0 0.0
        %v279 = vand.u32 %v172, 4294901760
        %v280 = vsub.f32 %v172, %v279
        %281 = vmatpush.msra.mxu0 %v280
        %v282 = vand.u32 %v171, 4294901760
        %v283 = vsub.f32 %v171, %v282
        %284 = vmatpush.msra.mxu0 %v283
        %v285 = vand.u32 %v170, 4294901760
        %v286 = vsub.f32 %v170, %v285
        %287 = vmatpush.msra.mxu0 %v286
        %v288 = vand.u32 %v169, 4294901760
        %v289 = vsub.f32 %v169, %v288
        %290 = vmatpush.msra.mxu0 %v289
        %v291 = vand.u32 %v168, 4294901760
        %v292 = vsub.f32 %v168, %v291
        %293 = vmatpush.msra.mxu0 %v292
        %v294 = vand.u32 %v167, 4294901760
        %v295 = vsub.f32 %v167, %v294
        %296 = vmatpush.msra.mxu0 %v295
        %v297 = vand.u32 %v166, 4294901760
        %v298 = vsub.f32 %v166, %v297
        %299 = vmatpush.msra.mxu0 %v298
        %v300 = vand.u32 %v165, 4294901760
        %v301 = vsub.f32 %v165, %v300
        %302 = vmatpush.msra.mxu0 %v301
        %v303 = vand.u32 %v175, 4294901760
        %v304 = vsub.f32 %v175, %v303
        %305 = vmatmul.f32.gmra.mxu0 %v304
        %v306 = vpop.f32.mrf.mxu0
        %v307 = vadd.f32 %v269, %v306
        %308 = vdwg.mxu0
        %309 = vmatpush.msra.mxu0 0.0
        %310 = vmatpush.msra.mxu0 0.0
        %311 = vmatpush.msra.mxu0 0.0
        %312 = vmatpush.msra.mxu0 0.0
        %313 = vmatpush.msra.mxu0 0.0
        %314 = vmatpush.msra.mxu0 0.0
        %315 = vmatpush.msra.mxu0 0.0
        %316 = vmatpush.msra.mxu0 0.0
        %v317 = vand.u32 %v172, 4294901760
        %318 = vmatpush.msra.mxu0 %v317
        %v319 = vand.u32 %v171, 4294901760
        %320 = vmatpush.msra.mxu0 %v319
        %v321 = vand.u32 %v170, 4294901760
        %322 = vmatpush.msra.mxu0 %v321
        %v323 = vand.u32 %v169, 4294901760
        %324 = vmatpush.msra.mxu0 %v323
        %v325 = vand.u32 %v168, 4294901760
        %326 = vmatpush.msra.mxu0 %v325
        %v327 = vand.u32 %v167, 4294901760
        %328 = vmatpush.msra.mxu0 %v327
        %v329 = vand.u32 %v166, 4294901760
        %330 = vmatpush.msra.mxu0 %v329
        %v331 = vand.u32 %v165, 4294901760
        %332 = vmatpush.msra.mxu0 %v331
        %v333 = vand.u32 %v175, 4294901760
        %v334 = vsub.f32 %v175, %v333
        %v335 = vand.u32 %v334, 4294901760
        %336 = vmatmul.f32.gmra.mxu0 %v335
        %v337 = vpop.f32.mrf.mxu0
        %v338 = vadd.f32 %v307, %v337
        %339 = vdwg.mxu0
        %340 = vmatpush.msra.mxu0 0.0
        %341 = vmatpush.msra.mxu0 0.0
        %342 = vmatpush.msra.mxu0 0.0
        %343 = vmatpush.msra.mxu0 0.0
        %344 = vmatpush.msra.mxu0 0.0
        %345 = vmatpush.msra.mxu0 0.0
        %346 = vmatpush.msra.mxu0 0.0
        %347 = vmatpush.msra.mxu0 0.0
        %v348 = vand.u32 %v172, 4294901760
        %v349 = vsub.f32 %v172, %v348
        %v350 = vand.u32 %v349, 4294901760
        %351 = vmatpush.msra.mxu0 %v350
        %v352 = vand.u32 %v171, 4294901760
        %v353 = vsub.f32 %v171, %v352
        %v354 = vand.u32 %v353, 4294901760
        %355 = vmatpush.msra.mxu0 %v354
        %v356 = vand.u32 %v170, 4294901760
        %v357 = vsub.f32 %v170, %v356
        %v358 = vand.u32 %v357, 4294901760
        %359 = vmatpush.msra.mxu0 %v358
        %v360 = vand.u32 %v169, 4294901760
        %v361 = vsub.f32 %v169, %v360
        %v362 = vand.u32 %v361, 4294901760
        %363 = vmatpush.msra.mxu0 %v362
        %v364 = vand.u32 %v168, 4294901760
        %v365 = vsub.f32 %v168, %v364
        %v366 = vand.u32 %v365, 4294901760
        %367 = vmatpush.msra.mxu0 %v366
        %v368 = vand.u32 %v167, 4294901760
        %v369 = vsub.f32 %v167, %v368
        %v370 = vand.u32 %v369, 4294901760
        %371 = vmatpush.msra.mxu0 %v370
        %v372 = vand.u32 %v166, 4294901760
        %v373 = vsub.f32 %v166, %v372
        %v374 = vand.u32 %v373, 4294901760
        %375 = vmatpush.msra.mxu0 %v374
        %v376 = vand.u32 %v165, 4294901760
        %v377 = vsub.f32 %v165, %v376
        %v378 = vand.u32 %v377, 4294901760
        %379 = vmatpush.msra.mxu0 %v378
        %v380 = vand.u32 %v175, 4294901760
        %381 = vmatmul.f32.gmra.mxu0 %v380
        %v382 = vpop.f32.mrf.mxu0
        %v383 = vadd.f32 %v338, %v382
        %384 = vdwg.mxu0
        %385 = vmatpush.msra.mxu0 0.0
        %386 = vmatpush.msra.mxu0 0.0
        %387 = vmatpush.msra.mxu0 0.0
        %388 = vmatpush.msra.mxu0 0.0
        %389 = vmatpush.msra.mxu0 0.0
        %390 = vmatpush.msra.mxu0 0.0
        %391 = vmatpush.msra.mxu0 0.0
        %392 = vmatpush.msra.mxu0 0.0
        %v393 = vand.u32 %v172, 4294901760
        %394 = vmatpush.msra.mxu0 %v393
        %v395 = vand.u32 %v171, 4294901760
        %396 = vmatpush.msra.mxu0 %v395
        %v397 = vand.u32 %v170, 4294901760
        %398 = vmatpush.msra.mxu0 %v397
        %v399 = vand.u32 %v169, 4294901760
        %400 = vmatpush.msra.mxu0 %v399
        %v401 = vand.u32 %v168, 4294901760
        %402 = vmatpush.msra.mxu0 %v401
        %v403 = vand.u32 %v167, 4294901760
        %404 = vmatpush.msra.mxu0 %v403
        %v405 = vand.u32 %v166, 4294901760
        %406 = vmatpush.msra.mxu0 %v405
        %v407 = vand.u32 %v165, 4294901760
        %408 = vmatpush.msra.mxu0 %v407
        %v409 = vand.u32 %v175, 4294901760
        %410 = vmatmul.f32.gmra.mxu0 %v409
        %v411 = vpop.f32.mrf.mxu0
        %v412 = vadd.f32 %v383, %v411
        %413 = vdwg.mxu0
        %414 = vst [vmem:[%s151] sm:$0xff] %v412
        %s415 = sand.u32 %s72, 1
        %s416 = scalar_lea.sflag [#allocation4], %s415
        %s417 = sand.u32 %s72, 1
        %s418 = smul.addr %s417, 8
        %s419 = scalar_lea.vmem [#allocation5], %s418
        // Predicated region
        $region33: #{tpu_custom_call.1} parent=27 // pred_check
          %p420 = pneg %p82
        $region34: #{tpu_custom_call.1} parent=27 // pred_check_branch
          %422 = sbr.rel (%p420) target = $region36
        $region35: #{tpu_custom_call.1} parent=27 // pred_region
          %424 = vsyncadd %s416, 0
          %s425 = smul.addr %s17, 8
          %s426 = scalar_lea.hbm %s2, %s425
          %s428 = sshll.u32 %s419, 4
          %s429 = int_to_ptr.vmem [resolvable:$true] %s428
          %s430 = sshll.u32 %s426, 4
          %s431 = int_to_ptr.hbm [resolvable:$true] %s430
          %433 = dma.vmem_to_hbm [thread:$0]  %s429, 128, %s431, %s416
        $region36: #{tpu_custom_call.1} parent=27 // pred_fallthru
          _
      $region28: #{tpu_custom_call.1} parent=5 // pred_fallthru
        _
      %p434 = scmp.le.s32.totalorder 2, %s12
      // Predicated region
      $region37: #{tpu_custom_call.1} parent=5 // pred_check
        %p435 = pneg %p434
      $region38: #{tpu_custom_call.1} parent=5 // pred_check_branch
        %437 = sbr.rel (%p435) target = $region40
      $region39: #{tpu_custom_call.1} parent=5 // pred_region
        %s438 = ssub.s32 %s12, 2
        // Predicated region
        $region41: #{tpu_custom_call.1} parent=39 // pred_check
          %p439 = pneg %p88
        $region42: #{tpu_custom_call.1} parent=39 // pred_check_branch
          %441 = sbr.rel (%p439) target = $region44
        $region43: #{tpu_custom_call.1} parent=39 // pred_region
          %s442 = sand.u32 %s73, 1
          %s443 = scalar_lea.sflag [#allocation4], %s442
          %s444 = sand.u32 %s73, 1
          %s445 = smul.addr %s444, 8
          %s446 = scalar_lea.vmem [#allocation5], %s445
          %448 = dma.done %s443, 128
        $region44: #{tpu_custom_call.1} parent=39 // pred_fallthru
          _
      $region40: #{tpu_custom_call.1} parent=5 // pred_fallthru
        _
    $region6: #{tpu_custom_call.1} parent=1 // loop_footer
      %s16 = sadd.s32 1, %s12
    $region7: #{tpu_custom_call.1} parent=1 // loop_footer_branch
      %11 = sbr.rel target = $region3
    $region8: #{tpu_custom_call.1} parent=1 // loop_exit
      _
    %449 = vsyncpa [#allocation3], 1
    %s450 = scalar_lea.sflag [#allocation3], 1
    %451 = vsyncpa %s450, 1
    %452 = vsyncpa [#allocation4], 1
    %s453 = scalar_lea.sflag [#allocation4], 1
    %454 = vsyncpa %s453, 1

</llo_original>
